<compile_context>
chip_gen: v5e
topology: v5e:2x2
jax: 0.10.0
libtpu: 0.0.40
codegen_flags: <defaults>
</compile_context>

<pallas_src>
import functools
import math

import jax
import jax.numpy as jnp
from jax.experimental import pallas as pl
from jax.experimental.pallas import tpu as pltpu


def _round_up(x, m):
    return ((x + m - 1) // m) * m


def _device_config():
    """Generation-specific default tiles / VMEM budget (per perf review)."""
    kind = ""
    try:
        kind = jax.devices()[0].device_kind.lower()
    except Exception:
        pass
    if "v7" in kind:
        # 64 MiB physical VMEM per TC, 2 TCs (megacore): moderate tiles,
        # explicit ~56 MiB cap, keep >= 2 row blocks so both cores get work.
        return dict(row_tile=1024, vocab_tile=1024,
                    vmem_limit=56 * 1024 * 1024, megacore=True)
    if "v6" in kind:
        # 128 MiB VMEM: big tiles -> decoder weight streamed only ~R/2048 times.
        return dict(row_tile=2048, vocab_tile=2048,
                    vmem_limit=96 * 1024 * 1024, megacore=False)
    if "v5" in kind:
        # v5e reaches the ~240 FLOP/byte balance point at tr ~ 512-1024; the
        # explicit VMEM limit is load-bearing (default scoped limit is 16 MiB).
        return dict(row_tile=1024, vocab_tile=1024,
                    vmem_limit=64 * 1024 * 1024, megacore=False)
    # Unknown chip: conservative, still far better than tr=256 / tv=512.
    return dict(row_tile=1024, vocab_tile=1024,
                vmem_limit=48 * 1024 * 1024, megacore=False)


# ----------------------------------------------------------------------------
# Fused kernel: dense -> GELU -> LayerNorm -> decoder (+ bias)
# ----------------------------------------------------------------------------
def mlm_head_kernel(x_ref, wd_ref, bd_ref, gamma_ref, beta_ref,
                    wdec_ref, bdec_ref, o_ref, t_ref, *, eps):
    # Vocab-tile index.  NOTE: the t_ref caching below is only correct because
    # this axis is innermost and marked "arbitrary" (sequential per core); do
    # not reorder the grid or mark it "parallel".
    j = pl.program_id(1)

    @pl.when(j == 0)
    def _():
        # dense: bf16 operands on the MXU, fp32 accumulate
        x = x_ref[...].astype(jnp.bfloat16)                       # (tr, H)
        h = jnp.dot(x, wd_ref[...], preferred_element_type=jnp.float32)
        h = h + bd_ref[...]                                       # fp32 bias

        # exact GELU: x * 0.5 * (1 + erf(x / sqrt(2)))  (fp32)
        h = 0.5 * h * (1.0 + jax.lax.erf(h * (1.0 / math.sqrt(2.0))))

        # one-pass LayerNorm over the hidden dim (fp32 statistics; the
        # E[x^2]-mu^2 form is clamped at 0 -- adequate for bf16-level tol.)
        mu = jnp.mean(h, axis=-1, keepdims=True)
        ms = jnp.mean(h * h, axis=-1, keepdims=True)
        var = jnp.maximum(ms - mu * mu, 0.0)
        h = (h - mu) * jax.lax.rsqrt(var + eps)
        h = h * gamma_ref[...] + beta_ref[...]

        t_ref[...] = h.astype(t_ref.dtype)                        # bf16 scratch

    # decoder tile: (tr, H) @ (H, tv) + bias, fp32 accumulate
    o_ref[...] = (
        jnp.dot(t_ref[...], wdec_ref[...], preferred_element_type=jnp.float32)
        + bdec_ref[...]
    ).astype(o_ref.dtype)


def pad_decoder_for_tiling(params, vocab_tile):
    """One-time pad of decoder weight/bias to a vocab_tile multiple so the big
    (H, V) weight is not re-padded (a ~H*V HBM copy) on every forward call."""
    V = params["decoder_w"].shape[1]
    V_pad = _round_up(V, vocab_tile)
    if V_pad == V:
        return params
    out = dict(params)
    out["decoder_w"] = jnp.pad(params["decoder_w"], ((0, 0), (0, V_pad - V)))
    out["decoder_b"] = jnp.pad(params["decoder_b"], ((0, 0), (0, V_pad - V)))
    return out


def bert_only_mlm_head(sequence_output, params, *, eps=1e-12, vocab_size=None,
                       row_tile=None, vocab_tile=None, vmem_limit_bytes=None,
                       out_dtype=jnp.float32):
    """sequence_output: [B, S, H] -> prediction_scores: [B, S, V] (out_dtype).

    `vocab_size` is the logical vocab size when params were pre-padded with
    pad_decoder_for_tiling; leave None to use the stored decoder width.
    """
    B, S, H = sequence_output.shape
    V_store = params["decoder_w"].shape[1]
    V = V_store if vocab_size is None else vocab_size
    R = B * S

    cfg = _device_config()
    row_tile = cfg["row_tile"] if row_tile is None else row_tile
    vocab_tile = cfg["vocab_tile"] if vocab_tile is None else vocab_tile
    vmem_limit_bytes = (cfg["vmem_limit"] if vmem_limit_bytes is None
                        else vmem_limit_bytes)

    # Row tile: sublane aligned.  On v7x keep at least 2 row blocks so the
    # "parallel" row axis is split across both TensorCores.
    tr = min(row_tile, _round_up(R, 8))
    if cfg["megacore"] and R >= 16:
        tr = min(tr, _round_up((R + 1) // 2, 8))
    tv = min(vocab_tile, _round_up(V_store, 128))

    R_pad = _round_up(R, tr)
    V_pad = _round_up(V_store, tv)

    # x streamed as bf16: halves the input DMA and the (tr, H) VMEM block.
    x = sequence_output.reshape(R, H).astype(jnp.bfloat16)
    if R_pad != R:
        x = jnp.pad(x, ((0, R_pad - R), (0, 0)))

    dec_w = params["decoder_w"]
    dec_b = params["decoder_b"]
    if V_pad != V_store:
        # Fallback only -- prefer pad_decoder_for_tiling() once at init time.
        dec_w = jnp.pad(dec_w, ((0, 0), (0, V_pad - V_store)))
        dec_b = jnp.pad(dec_b, ((0, 0), (0, V_pad - V_store)))

    grid = (R_pad // tr, V_pad // tv)

    cost = pl.CostEstimate(
        flops=int(2 * R * H * H + 2 * R * H * V_pad),
        transcendentals=int(R * H),                      # erf
        bytes_accessed=int(R * H * 2 + H * H * 2 + H * V_pad * 2
                           + R * V_pad * jnp.dtype(out_dtype).itemsize),
    )

    scores = pl.pallas_call(
        functools.partial(mlm_head_kernel, eps=eps),
        out_shape=jax.ShapeDtypeStruct((R_pad, V_pad), out_dtype),
        grid_spec=pltpu.PrefetchScalarGridSpec(
            num_scalar_prefetch=0,
            grid=grid,
            in_specs=[
                pl.BlockSpec((tr, H), lambda i, j: (i, 0)),   # x row tile (bf16)
                pl.BlockSpec((H, H), lambda i, j: (0, 0)),    # dense W (resident)
                pl.BlockSpec((1, H), lambda i, j: (0, 0)),    # dense bias
                pl.BlockSpec((1, H), lambda i, j: (0, 0)),    # LN gamma
                pl.BlockSpec((1, H), lambda i, j: (0, 0)),    # LN beta
                pl.BlockSpec((H, tv), lambda i, j: (0, j)),   # decoder W tile
                pl.BlockSpec((1, tv), lambda i, j: (0, j)),   # decoder bias tile
            ],
            out_specs=pl.BlockSpec((tr, tv), lambda i, j: (i, j)),
            scratch_shapes=[pltpu.VMEM((tr, H), jnp.bfloat16)],  # transformed rows
        ),
        compiler_params=pltpu.CompilerParams(
            # Row axis "parallel" (megacore); vocab axis MUST stay "arbitrary"
            # (sequential) -- the t_ref caching in the kernel relies on it.
            dimension_semantics=("parallel", "arbitrary"),
            vmem_limit_bytes=vmem_limit_bytes,
        ),
        cost_estimate=cost,
    )(x, params["dense_w"], params["dense_b"],
      params["ln_gamma"], params["ln_beta"], dec_w, dec_b)

    # Only pay the slice (a full read+write of the logits) if padding happened.
    if R_pad != R or V_pad != V:
        scores = scores[:R, :V]
    return scores.reshape(B, S, V)


# ----------------------------------------------------------------------------
# Deterministic parameter init (shapes from BertOnlyMLMHead.__init__)
# ----------------------------------------------------------------------------
def init_params(key, hidden_size, vocab_size):
    k1, k2, k3 = jax.random.split(key, 3)
    scale = 0.02
    return {
        # nn.Linear(H, H): weight (H_out, H_in) -> stored transposed (H_in, H_out), bf16
        "dense_w": (scale * jax.random.normal(
            k1, (hidden_size, hidden_size), jnp.float32)).astype(jnp.bfloat16),
        "dense_b": scale * jax.random.normal(k2, (1, hidden_size), jnp.float32),
        # BertLayerNorm(H)
        "ln_gamma": jnp.ones((1, hidden_size), jnp.float32),
        "ln_beta": jnp.zeros((1, hidden_size), jnp.float32),
        # nn.Linear(H, V, bias=False): weight (V, H) -> stored transposed (H, V), bf16
        "decoder_w": (scale * jax.random.normal(
            k3, (hidden_size, vocab_size), jnp.float32)).astype(jnp.bfloat16),
        # tied bias parameter: torch.zeros(vocab_size)
        "decoder_b": jnp.zeros((1, vocab_size), jnp.float32),
    }


def reference_mlm_head(x, params, eps=1e-12):
    """Pure fp32 JAX reference (weights upcast from the stored bf16 values)."""
    wd = params["dense_w"].astype(jnp.float32)
    wdec = params["decoder_w"].astype(jnp.float32)
    h = x @ wd + params["dense_b"][0]
    h = 0.5 * h * (1.0 + jax.lax.erf(h / jnp.sqrt(2.0)))
    mu = jnp.mean(h, axis=-1, keepdims=True)
    var = jnp.mean((h - mu) ** 2, axis=-1, keepdims=True)
    h = (h - mu) / jnp.sqrt(var + eps)
    h = h * params["ln_gamma"][0] + params["ln_beta"][0]
    return h @ wdec + params["decoder_b"][0]


if __name__ == "__main__":
    # Small shapes; V=1000 and R=46 deliberately NOT tile multiples to exercise
    # the padding paths.
    B, S, H, V = 2, 23, 128, 1000

    key = jax.random.PRNGKey(0)
    k_x, k_p = jax.random.split(key)
    sequence_output = jax.random.normal(k_x, (B, S, H), jnp.float32)
    params = init_params(k_p, H, V)
    ref = reference_mlm_head(sequence_output, params)

    # 1) explicit small tiles: exercises the multi-block grid + per-call
    #    row/vocab padding fallback path.
    s1 = bert_only_mlm_head(sequence_output, params, row_tile=8, vocab_tile=512)
    s1 = jax.block_until_ready(s1)

    # 2) auto (generation-specific) tiles with a pre-padded decoder so the big
    #    weight is never re-padded per call (the production-shaped path).
    cfg = _device_config()
    tv = min(cfg["vocab_tile"], _round_up(V, 128))
    padded_params = pad_decoder_for_tiling(params, tv)
    s2 = bert_only_mlm_head(sequence_output, padded_params, vocab_size=V)
    s2 = jax.block_until_ready(s2)

    for scores in (s1, s2):
        assert scores.shape == (B, S, V)
        assert bool(jnp.all(jnp.isfinite(scores))), "non-finite values in output"
        # bf16 matmul operands (fp32 accumulate) vs pure-fp32 reference -> ~1% tol.
        assert jnp.allclose(scores, ref, atol=2e-2, rtol=2e-2), "mismatch vs reference"

    print("KERNEL_OK")
</pallas_src>

<mosaic_0001>
module attributes {stable_mosaic.version = 11 : i64} {
  func.func @mlm_head_kernel(%arg0: i32, %arg1: i32, %arg2: memref<8x128xbf16, #tpu.memory_space<vmem>>, %arg3: memref<128x128xbf16, #tpu.memory_space<vmem>>, %arg4: memref<1x128xf32, #tpu.memory_space<vmem>>, %arg5: memref<1x128xf32, #tpu.memory_space<vmem>>, %arg6: memref<1x128xf32, #tpu.memory_space<vmem>>, %arg7: memref<128x512xbf16, #tpu.memory_space<vmem>>, %arg8: memref<1x512xf32, #tpu.memory_space<vmem>>, %arg9: memref<8x512xf32, #tpu.memory_space<vmem>>, %arg10: memref<8x128xbf16, #tpu.memory_space<vmem>>) attributes {dimension_semantics = [#tpu.dimension_semantics<parallel>, #tpu.dimension_semantics<arbitrary>], iteration_bounds = array<i64: 6, 2>, scalar_prefetch = 0 : i64, scratch_operands = 1 : i64, tpu.core_type = #tpu.core_type<tc>, window_params = [{transform_indices = @transform_0, window_bounds = array<i64: 8, 128>}, {pipeline_mode = #tpu.pipeline_mode<synchronous>, transform_indices = @transform_1, window_bounds = array<i64: 128, 128>}, {pipeline_mode = #tpu.pipeline_mode<synchronous>, transform_indices = @transform_2, window_bounds = array<i64: 1, 128>}, {pipeline_mode = #tpu.pipeline_mode<synchronous>, transform_indices = @transform_3, window_bounds = array<i64: 1, 128>}, {pipeline_mode = #tpu.pipeline_mode<synchronous>, transform_indices = @transform_4, window_bounds = array<i64: 1, 128>}, {transform_indices = @transform_5, window_bounds = array<i64: 128, 512>}, {transform_indices = @transform_6, window_bounds = array<i64: 1, 512>}, {transform_indices = @transform_7, window_bounds = array<i64: 8, 512>}]} {
    %c0_i32 = arith.constant 0 : i32
    %0 = arith.cmpi eq, %arg1, %c0_i32 : i32
    %1 = arith.extui %0 : i1 to i32
    %c0_i32_0 = arith.constant 0 : i32
    %2 = arith.cmpi ne, %1, %c0_i32_0 : i32
    scf.if %2 {
      %c0_8 = arith.constant 0 : index
      %c0_9 = arith.constant 0 : index
      %10 = vector.load %arg2[%c0_8, %c0_9] : memref<8x128xbf16, #tpu.memory_space<vmem>>, vector<8x128xbf16>
      %c0_10 = arith.constant 0 : index
      %c0_11 = arith.constant 0 : index
      %11 = vector.load %arg3[%c0_10, %c0_11] : memref<128x128xbf16, #tpu.memory_space<vmem>>, vector<128x128xbf16>
      %cst_12 = arith.constant dense<0.000000e+00> : vector<8x128xf32>
      %12 = tpu.matmul %10, %11, %cst_12 {dimension_numbers = #tpu.dot_dimension_numbers<[1], [0], [0], [1], [0, 0, 1, 1], [], []>} : vector<8x128xbf16>, vector<128x128xbf16>, vector<8x128xf32> -> vector<8x128xf32>
      %c0_13 = arith.constant 0 : index
      %c0_14 = arith.constant 0 : index
      %13 = vector.load %arg4[%c0_13, %c0_14] : memref<1x128xf32, #tpu.memory_space<vmem>>, vector<1x128xf32>
      %14 = vector.broadcast %13 : vector<1x128xf32> to vector<8x128xf32>
      %15 = arith.addf %12, %14 : vector<8x128xf32>
      %cst_15 = arith.constant 5.000000e-01 : f32
      %16 = vector.broadcast %cst_15 : f32 to vector<8x128xf32>
      %17 = arith.mulf %16, %15 : vector<8x128xf32>
      %cst_16 = arith.constant 0.707106769 : f32
      %18 = vector.broadcast %cst_16 : f32 to vector<8x128xf32>
      %19 = arith.mulf %15, %18 : vector<8x128xf32>
      %20 = math.erf %19 : vector<8x128xf32>
      %cst_17 = arith.constant 1.000000e+00 : f32
      %21 = vector.broadcast %cst_17 : f32 to vector<8x128xf32>
      %22 = arith.addf %21, %20 : vector<8x128xf32>
      %23 = arith.mulf %17, %22 : vector<8x128xf32>
      %cst_18 = arith.constant dense<0.000000e+00> : vector<8xf32>
      %24 = vector.multi_reduction <add>, %23, %cst_18 [1] : vector<8x128xf32> to vector<8xf32>
      %25 = vector.shape_cast %24 : vector<8xf32> to vector<8x1xf32>
      %cst_19 = arith.constant 1.280000e+02 : f32
      %26 = vector.broadcast %cst_19 : f32 to vector<8x1xf32>
      %27 = arith.divf %25, %26 : vector<8x1xf32>
      %28 = arith.mulf %23, %23 : vector<8x128xf32>
      %cst_20 = arith.constant dense<0.000000e+00> : vector<8xf32>
      %29 = vector.multi_reduction <add>, %28, %cst_20 [1] : vector<8x128xf32> to vector<8xf32>
      %30 = vector.shape_cast %29 : vector<8xf32> to vector<8x1xf32>
      %cst_21 = arith.constant 1.280000e+02 : f32
      %31 = vector.broadcast %cst_21 : f32 to vector<8x1xf32>
      %32 = arith.divf %30, %31 : vector<8x1xf32>
      %33 = arith.mulf %27, %27 : vector<8x1xf32>
      %34 = arith.subf %32, %33 : vector<8x1xf32>
      %cst_22 = arith.constant 0.000000e+00 : f32
      %35 = vector.broadcast %cst_22 : f32 to vector<8x1xf32>
      %36 = arith.maximumf %34, %35 : vector<8x1xf32>
      %37 = vector.broadcast %27 : vector<8x1xf32> to vector<8x128xf32>
      %38 = arith.subf %23, %37 : vector<8x128xf32>
      %cst_23 = arith.constant 9.99999996E-13 : f32
      %39 = vector.broadcast %cst_23 : f32 to vector<8x1xf32>
      %40 = arith.addf %36, %39 : vector<8x1xf32>
      %41 = math.rsqrt %40 : vector<8x1xf32>
      %42 = vector.broadcast %41 : vector<8x1xf32> to vector<8x128xf32>
      %43 = arith.mulf %38, %42 : vector<8x128xf32>
      %c0_24 = arith.constant 0 : index
      %c0_25 = arith.constant 0 : index
      %44 = vector.load %arg5[%c0_24, %c0_25] : memref<1x128xf32, #tpu.memory_space<vmem>>, vector<1x128xf32>
      %45 = vector.broadcast %44 : vector<1x128xf32> to vector<8x128xf32>
      %46 = arith.mulf %43, %45 : vector<8x128xf32>
      %c0_26 = arith.constant 0 : index
      %c0_27 = arith.constant 0 : index
      %47 = vector.load %arg6[%c0_26, %c0_27] : memref<1x128xf32, #tpu.memory_space<vmem>>, vector<1x128xf32>
      %48 = vector.broadcast %47 : vector<1x128xf32> to vector<8x128xf32>
      %49 = arith.addf %46, %48 : vector<8x128xf32>
      %50 = arith.truncf %49 : vector<8x128xf32> to vector<8x128xbf16>
      %c0_28 = arith.constant 0 : index
      %c0_29 = arith.constant 0 : index
      %51 = vector.load %arg10[%c0_28, %c0_29] : memref<8x128xbf16, #tpu.memory_space<vmem>>, vector<8x128xbf16>
      tpu.vector_store %arg10[%c0_28, %c0_29], %50 {strides = array<i32>} : memref<8x128xbf16, #tpu.memory_space<vmem>>, vector<8x128xbf16>,
    } else {
    }
    %c0 = arith.constant 0 : index
    %c0_1 = arith.constant 0 : index
    %3 = vector.load %arg10[%c0, %c0_1] : memref<8x128xbf16, #tpu.memory_space<vmem>>, vector<8x128xbf16>
    %c0_2 = arith.constant 0 : index
    %c0_3 = arith.constant 0 : index
    %4 = vector.load %arg7[%c0_2, %c0_3] : memref<128x512xbf16, #tpu.memory_space<vmem>>, vector<128x512xbf16>
    %cst = arith.constant dense<0.000000e+00> : vector<8x512xf32>
    %5 = tpu.matmul %3, %4, %cst {dimension_numbers = #tpu.dot_dimension_numbers<[1], [0], [0], [1], [0, 0, 1, 1], [], []>} : vector<8x128xbf16>, vector<128x512xbf16>, vector<8x512xf32> -> vector<8x512xf32>
    %c0_4 = arith.constant 0 : index
    %c0_5 = arith.constant 0 : index
    %6 = vector.load %arg8[%c0_4, %c0_5] : memref<1x512xf32, #tpu.memory_space<vmem>>, vector<1x512xf32>
    %7 = vector.broadcast %6 : vector<1x512xf32> to vector<8x512xf32>
    %8 = arith.addf %5, %7 : vector<8x512xf32>
    %c0_6 = arith.constant 0 : index
    %c0_7 = arith.constant 0 : index
    %9 = vector.load %arg9[%c0_6, %c0_7] : memref<8x512xf32, #tpu.memory_space<vmem>>, vector<8x512xf32>
    tpu.vector_store %arg9[%c0_6, %c0_7], %8 {strides = array<i32>} : memref<8x512xf32, #tpu.memory_space<vmem>>, vector<8x512xf32>,
    return
  }
  func.func @transform_0(%arg0: i32, %arg1: i32) -> (i32, i32) {
    %c0_i32 = arith.constant 0 : i32
    %c0_i32_0 = arith.constant 0 : i32
    return %arg0, %c0_i32 : i32, i32
  }
  func.func @transform_1(%arg0: i32, %arg1: i32) -> (i32, i32) {
    %c0_i32 = arith.constant 0 : i32
    %c0_i32_0 = arith.constant 0 : i32
    %c0_i32_1 = arith.constant 0 : i32
    return %c0_i32, %c0_i32_0 : i32, i32
  }
  func.func @transform_2(%arg0: i32, %arg1: i32) -> (i32, i32) {
    %c0_i32 = arith.constant 0 : i32
    %c0_i32_0 = arith.constant 0 : i32
    %c0_i32_1 = arith.constant 0 : i32
    return %c0_i32, %c0_i32_0 : i32, i32
  }
  func.func @transform_3(%arg0: i32, %arg1: i32) -> (i32, i32) {
    %c0_i32 = arith.constant 0 : i32
    %c0_i32_0 = arith.constant 0 : i32
    %c0_i32_1 = arith.constant 0 : i32
    return %c0_i32, %c0_i32_0 : i32, i32
  }
  func.func @transform_4(%arg0: i32, %arg1: i32) -> (i32, i32) {
    %c0_i32 = arith.constant 0 : i32
    %c0_i32_0 = arith.constant 0 : i32
    %c0_i32_1 = arith.constant 0 : i32
    return %c0_i32, %c0_i32_0 : i32, i32
  }
  func.func @transform_5(%arg0: i32, %arg1: i32) -> (i32, i32) {
    %c0_i32 = arith.constant 0 : i32
    %c0_i32_0 = arith.constant 0 : i32
    return %c0_i32, %arg1 : i32, i32
  }
  func.func @transform_6(%arg0: i32, %arg1: i32) -> (i32, i32) {
    %c0_i32 = arith.constant 0 : i32
    %c0_i32_0 = arith.constant 0 : i32
    return %c0_i32, %arg1 : i32, i32
  }
  func.func @transform_7(%arg0: i32, %arg1: i32) -> (i32, i32) {
    %c0_i32 = arith.constant 0 : i32
    return %arg0, %arg1 : i32, i32
  }
}

</mosaic_0001>

<llo_original>
// kernel: tpu_custom_call.1
$region0: #{tpu_custom_call.1}
  #allocation0 [shape = 'u32[]', space=smem, size = 0x4, offset = 0x4, fixed_abs, tag = 'smem constant byte address 0x4 - core index']
  #allocation1 [shape = 'u32[72,128]{1,0:T(1,128)}', space=vmem, size = 0x9000, scoped, tag = 'internal scratch']
  #allocation2 [shape = 'bf16[8,128]{1,0:T(8,128)(2,1)}', space=vmem, size = 0x800, scoped, tag = 'scratch operand']
  %s0 = inlined_call_operand.hbm [shape: bf16[48,128], index: 0, kind: input, shape index: {}]
  %s1 = inlined_call_operand.hbm [shape: bf16[128,128], index: 1, kind: input, shape index: {}]
  %s2 = inlined_call_operand.vmem [shape: f32[1,128], index: 2, kind: input, shape index: {}]
  %s3 = inlined_call_operand.vmem [shape: f32[1,128], index: 3, kind: input, shape index: {}]
  %s4 = inlined_call_operand.vmem [shape: f32[1,128], index: 4, kind: input, shape index: {}]
  %s5 = inlined_call_operand.hbm [shape: bf16[128,1024], index: 5, kind: input, shape index: {}]
  %s6 = inlined_call_operand.hbm [shape: f32[1,1024], index: 6, kind: input, shape index: {}]
  %s7 = inlined_call_operand.hbm [shape: f32[48,1024], index: 7, kind: output, shape index: {}]
  %s8 = sld [smem:[#allocation0]]
  $region81: #{tpu_custom_call.1} parent=0
    _
  %s10 = ssub.s32 1, %s8
  %s11 = scalar_select 0, %s10, %s8
  $region1: #{tpu_custom_call.1} parent=0
    #allocation3 [shape = 'u8[4096]{0}', space=vmem, size = 0x1000, scoped, tag = 'input window, operand 0']
    #allocation4 [shape = 's32[2]{0}', space=sflag, size = 0x8, scoped, tag = 'scoped memory for tpu_custom_call.1']
    #allocation5 [shape = 's32[2]{0}', space=sflag, size = 0x8, scoped, tag = 'scoped memory for tpu_custom_call.1']
    #allocation6 [shape = 'u8[32768]{0}', space=vmem, size = 0x8000, scoped, tag = 'input window, operand 1, single buffered']
    #allocation7 [shape = 's32[1]{0}', space=sflag, size = 0x4, scoped, tag = 'scoped memory for tpu_custom_call.1']
    #allocation8 [shape = 'u8[262144]{0}', space=vmem, size = 0x40000, scoped, tag = 'input window, operand 5']
    #allocation9 [shape = 'u8[4096]{0}', space=vmem, size = 0x1000, scoped, tag = 'input window, operand 6']
    #allocation10 [shape = 'u8[32768]{0}', space=vmem, size = 0x8000, scoped, tag = 'output window, operand 0']
    %12 = vsyncpa [#allocation4], 0
    %s13 = scalar_lea.sflag [#allocation4], 1
    %14 = vsyncpa %s13, 0
    %15 = vsyncpa [#allocation7], 0
    %16 = vsyncpa [#allocation5], 0
    %s17 = scalar_lea.sflag [#allocation5], 1
    %18 = vsyncpa %s17, 0
    loop: start=0, step=1, limit=14
    $region2: #{tpu_custom_call.1} parent=1 // loop_pre_header
      _
    $region3: #{tpu_custom_call.1} parent=1 // loop_header
      %s20 = sphi 0, %s24
      %p21 = scmp.ge.s32.totalorder %s20, 14
      %s27 = sphi 0, %s39
      %s28 = sphi 0, %s35
      %s29 = sphi 0, %s27
      %s30 = sphi 0, %s28
      %s31 = sphi 0, %s29
      %s32 = sphi 0, %s30
      %s42 = sphi 0, %s44
      %s45 = sphi 0, %s42
      %s46 = sphi 0, %s45
      %s62 = sphi 0, %s46
      %s66 = sphi 0, %s66
      %s68 = sphi 0, %s66
      %s69 = sphi 0, %s68
      %s83 = sphi 0, %s69
      %s87 = sphi 0, %s87
      %s89 = sphi 0, %s87
      %s90 = sphi 0, %s89
      %s104 = sphi 0, %s90
      %s108 = sphi 0, %s108
      %s110 = sphi 0, %s108
      %s111 = sphi 0, %s110
      %s125 = sphi 0, %s111
      %s129 = sphi 0, %s129
      %s131 = sphi 0, %s129
      %s132 = sphi 0, %s131
      %s146 = sphi 0, %s132
      %s152 = sphi 0, %s154
      %s155 = sphi 0, %s152
      %s156 = sphi 0, %s155
      %s172 = sphi 0, %s156
      %s178 = sphi 0, %s180
      %s181 = sphi 0, %s178
      %s182 = sphi 0, %s181
      %s198 = sphi 0, %s182
      %s206 = sphi 0, %s208
      %s209 = sphi 0, %s206
      %s210 = sphi 0, %s209
      %s226 = sphi 0, %s210
    $region4: #{tpu_custom_call.1} parent=1 // loop_header_branch
      %23 = sbr.rel (%p21) target = $region8
    $region5: #{tpu_custom_call.1} parent=1 // loop_body
      %s25 = ssub.s32 %s20, 1
      %s26 = ssub.s32 %s20, 2
      %s33 = sadd.s32 1, %s28
      %p34 = scmp.ge.s32.totalorder %s33, 2
      %s35 = scalar_select %p34, 0, %s33
      %s36 = sadd.s32 1, %s27
      %s37 = scalar_select %p34, %s36, %s27
      %p38 = scmp.ge.s32.totalorder %s37, 6
      %s39 = scalar_select %p38, 0, %s37
      %s40 = ssub.s32 %s27, %s39
      %p41 = scmp.eq.s32.totalorder %s40, 0
      %s43 = sadd.s32 %s42, 1
      %s44 = scalar_select %p41, %s42, %s43
      %p47 = pneg %p41
      %p48 = scmp.eq.s32.totalorder %s20, 11
      %p49 = por %p47, %p48
      %p50 = scmp.ne.s32.totalorder %s42, %s45
      %p51 = scmp.eq.s32.totalorder %s20, 0
      %p52 = por %p50, %p51
      %p53 = scmp.ne.s32.totalorder %s42, %s45
      %p54 = scmp.eq.s32.totalorder %s25, 11
      %p55 = por %p53, %p54
      %p56 = scmp.ne.s32.totalorder %s45, %s46
      %p57 = scmp.eq.s32.totalorder %s25, 0
      %p58 = por %p56, %p57
      %p59 = scmp.ne.s32.totalorder %s45, %s46
      %p60 = scmp.eq.s32.totalorder %s26, 11
      %p61 = por %p59, %p60
      %p63 = scmp.ne.s32.totalorder %s46, %s62
      %p64 = scmp.eq.s32.totalorder %s26, 0
      %p65 = por %p63, %p64
      %s67 = sadd.s32 %s66, 1
      %p70 = scmp.eq.s32.totalorder %s20, 11
      %p71 = scmp.ne.s32.totalorder %s66, %s68
      %p72 = scmp.eq.s32.totalorder %s20, 0
      %p73 = por %p71, %p72
      %p74 = scmp.ne.s32.totalorder %s66, %s68
      %p75 = scmp.eq.s32.totalorder %s25, 11
      %p76 = por %p74, %p75
      %p77 = scmp.ne.s32.totalorder %s68, %s69
      %p78 = scmp.eq.s32.totalorder %s25, 0
      %p79 = por %p77, %p78
      %p80 = scmp.ne.s32.totalorder %s68, %s69
      %p81 = scmp.eq.s32.totalorder %s26, 11
      %p82 = por %p80, %p81
      %p84 = scmp.ne.s32.totalorder %s69, %s83
      %p85 = scmp.eq.s32.totalorder %s26, 0
      %p86 = por %p84, %p85
      %s88 = sadd.s32 %s87, 1
      %p91 = scmp.eq.s32.totalorder %s20, 11
      %p92 = scmp.ne.s32.totalorder %s87, %s89
      %p93 = scmp.eq.s32.totalorder %s20, 0
      %p94 = por %p92, %p93
      %p95 = scmp.ne.s32.totalorder %s87, %s89
      %p96 = scmp.eq.s32.totalorder %s25, 11
      %p97 = por %p95, %p96
      %p98 = scmp.ne.s32.totalorder %s89, %s90
      %p99 = scmp.eq.s32.totalorder %s25, 0
      %p100 = por %p98, %p99
      %p101 = scmp.ne.s32.totalorder %s89, %s90
      %p102 = scmp.eq.s32.totalorder %s26, 11
      %p103 = por %p101, %p102
      %p105 = scmp.ne.s32.totalorder %s90, %s104
      %p106 = scmp.eq.s32.totalorder %s26, 0
      %p107 = por %p105, %p106
      %s109 = sadd.s32 %s108, 1
      %p112 = scmp.eq.s32.totalorder %s20, 11
      %p113 = scmp.ne.s32.totalorder %s108, %s110
      %p114 = scmp.eq.s32.totalorder %s20, 0
      %p115 = por %p113, %p114
      %p116 = scmp.ne.s32.totalorder %s108, %s110
      %p117 = scmp.eq.s32.totalorder %s25, 11
      %p118 = por %p116, %p117
      %p119 = scmp.ne.s32.totalorder %s110, %s111
      %p120 = scmp.eq.s32.totalorder %s25, 0
      %p121 = por %p119, %p120
      %p122 = scmp.ne.s32.totalorder %s110, %s111
      %p123 = scmp.eq.s32.totalorder %s26, 11
      %p124 = por %p122, %p123
      %p126 = scmp.ne.s32.totalorder %s111, %s125
      %p127 = scmp.eq.s32.totalorder %s26, 0
      %p128 = por %p126, %p127
      %s130 = sadd.s32 %s129, 1
      %p133 = scmp.eq.s32.totalorder %s20, 11
      %p134 = scmp.ne.s32.totalorder %s129, %s131
      %p135 = scmp.eq.s32.totalorder %s20, 0
      %p136 = por %p134, %p135
      %p137 = scmp.ne.s32.totalorder %s129, %s131
      %p138 = scmp.eq.s32.totalorder %s25, 11
      %p139 = por %p137, %p138
      %p140 = scmp.ne.s32.totalorder %s131, %s132
      %p141 = scmp.eq.s32.totalorder %s25, 0
      %p142 = por %p140, %p141
      %p143 = scmp.ne.s32.totalorder %s131, %s132
      %p144 = scmp.eq.s32.totalorder %s26, 11
      %p145 = por %p143, %p144
      %p147 = scmp.ne.s32.totalorder %s132, %s146
      %p148 = scmp.eq.s32.totalorder %s26, 0
      %p149 = por %p147, %p148
      %s150 = ssub.s32 %s28, %s35
      %p151 = scmp.eq.s32.totalorder %s150, 0
      %s153 = sadd.s32 %s152, 1
      %s154 = scalar_select %p151, %s152, %s153
      %p157 = pneg %p151
      %p158 = scmp.eq.s32.totalorder %s20, 11
      %p159 = por %p157, %p158
      %p160 = scmp.ne.s32.totalorder %s152, %s155
      %p161 = scmp.eq.s32.totalorder %s20, 0
      %p162 = por %p160, %p161
      %p163 = scmp.ne.s32.totalorder %s152, %s155
      %p164 = scmp.eq.s32.totalorder %s25, 11
      %p165 = por %p163, %p164
      %p166 = scmp.ne.s32.totalorder %s155, %s156
      %p167 = scmp.eq.s32.totalorder %s25, 0
      %p168 = por %p166, %p167
      %p169 = scmp.ne.s32.totalorder %s155, %s156
      %p170 = scmp.eq.s32.totalorder %s26, 11
      %p171 = por %p169, %p170
      %p173 = scmp.ne.s32.totalorder %s156, %s172
      %p174 = scmp.eq.s32.totalorder %s26, 0
      %p175 = por %p173, %p174
      %s176 = ssub.s32 %s28, %s35
      %p177 = scmp.eq.s32.totalorder %s176, 0
      %s179 = sadd.s32 %s178, 1
      %s180 = scalar_select %p177, %s178, %s179
      %p183 = pneg %p177
      %p184 = scmp.eq.s32.totalorder %s20, 11
      %p185 = por %p183, %p184
      %p186 = scmp.ne.s32.totalorder %s178, %s181
      %p187 = scmp.eq.s32.totalorder %s20, 0
      %p188 = por %p186, %p187
      %p189 = scmp.ne.s32.totalorder %s178, %s181
      %p190 = scmp.eq.s32.totalorder %s25, 11
      %p191 = por %p189, %p190
      %p192 = scmp.ne.s32.totalorder %s181, %s182
      %p193 = scmp.eq.s32.totalorder %s25, 0
      %p194 = por %p192, %p193
      %p195 = scmp.ne.s32.totalorder %s181, %s182
      %p196 = scmp.eq.s32.totalorder %s26, 11
      %p197 = por %p195, %p196
      %p199 = scmp.ne.s32.totalorder %s182, %s198
      %p200 = scmp.eq.s32.totalorder %s26, 0
      %p201 = por %p199, %p200
      %s202 = ssub.s32 %s27, %s39
      %s203 = ssub.s32 %s28, %s35
      %s204 = sor.u32 %s202, %s203
      %p205 = scmp.eq.s32.totalorder %s204, 0
      %s207 = sadd.s32 %s206, 1
      %s208 = scalar_select %p205, %s206, %s207
      %p211 = pneg %p205
      %p212 = scmp.eq.s32.totalorder %s20, 11
      %p213 = por %p211, %p212
      %p214 = scmp.ne.s32.totalorder %s206, %s209
      %p215 = scmp.eq.s32.totalorder %s20, 0
      %p216 = por %p214, %p215
      %p217 = scmp.ne.s32.totalorder %s206, %s209
      %p218 = scmp.eq.s32.totalorder %s25, 11
      %p219 = por %p217, %p218
      %p220 = scmp.ne.s32.totalorder %s209, %s210
      %p221 = scmp.eq.s32.totalorder %s25, 0
      %p222 = por %p220, %p221
      %p223 = scmp.ne.s32.totalorder %s209, %s210
      %p224 = scmp.eq.s32.totalorder %s26, 11
      %p225 = por %p223, %p224
      %p227 = scmp.ne.s32.totalorder %s210, %s226
      %p228 = scmp.eq.s32.totalorder %s26, 0
      %p229 = por %p227, %p228
      %p230 = scmp.le.s32.totalorder 1, %s20
      %p231 = scmp.lt.s32.totalorder %s20, 13
      %p232 = pnand %p230, %p231
      %p233 = pneg %p232
      // Predicated region
      $region9: #{tpu_custom_call.1} parent=5 // pred_check
        _
      $region10: #{tpu_custom_call.1} parent=5 // pred_check_branch
        %235 = sbr.rel (%p232) target = $region12
      $region11: #{tpu_custom_call.1} parent=5 // pred_region
        %s236 = ssub.s32 %s20, 1
        // Predicated region
        $region13: #{tpu_custom_call.1} parent=11 // pred_check
          %p237 = pneg %p79
        $region14: #{tpu_custom_call.1} parent=11 // pred_check_branch
          %239 = sbr.rel (%p237) target = $region16
        $region15: #{tpu_custom_call.1} parent=11 // pred_region
          %241 = vsyncadd [#allocation7], 0
          %s242 = sshll.u32 %s1, 4
          %s243 = int_to_ptr.hbm [resolvable:$true] %s242
          %s244 = sshll.u32 [#allocation6], 4
          %s245 = int_to_ptr.vmem [resolvable:$true] %s244
          %250 = dma.hbm_to_vmem [thread:$0]  %s243, 1024, %s245, [#allocation7], 64, 64, 4
        $region16: #{tpu_custom_call.1} parent=11 // pred_fallthru
          _
        // Predicated region
        $region17: #{tpu_custom_call.1} parent=11 // pred_check
          %p251 = pneg %p100
        $region18: #{tpu_custom_call.1} parent=11 // pred_check_branch
          %253 = sbr.rel (%p251) target = $region20
        $region19: #{tpu_custom_call.1} parent=11 // pred_region
          _
        $region20: #{tpu_custom_call.1} parent=11 // pred_fallthru
          _
        // Predicated region
        $region21: #{tpu_custom_call.1} parent=11 // pred_check
          %p254 = pneg %p121
        $region22: #{tpu_custom_call.1} parent=11 // pred_check_branch
          %256 = sbr.rel (%p254) target = $region24
        $region23: #{tpu_custom_call.1} parent=11 // pred_region
          _
        $region24: #{tpu_custom_call.1} parent=11 // pred_fallthru
          _
        // Predicated region
        $region25: #{tpu_custom_call.1} parent=11 // pred_check
          %p257 = pneg %p142
        $region26: #{tpu_custom_call.1} parent=11 // pred_check_branch
          %259 = sbr.rel (%p257) target = $region28
        $region27: #{tpu_custom_call.1} parent=11 // pred_region
          _
        $region28: #{tpu_custom_call.1} parent=11 // pred_fallthru
          _
      $region12: #{tpu_custom_call.1} parent=5 // pred_fallthru
        _
      %p260 = scmp.lt.s32.totalorder %s20, 12
      // Predicated region
      $region29: #{tpu_custom_call.1} parent=5 // pred_check
        %p261 = pneg %p260
      $region30: #{tpu_custom_call.1} parent=5 // pred_check_branch
        %263 = sbr.rel (%p261) target = $region32
      $region31: #{tpu_custom_call.1} parent=5 // pred_region
        // Predicated region
        $region33: #{tpu_custom_call.1} parent=31 // pred_check
          %p264 = pneg %p52
        $region34: #{tpu_custom_call.1} parent=31 // pred_check_branch
          %266 = sbr.rel (%p264) target = $region36
        $region35: #{tpu_custom_call.1} parent=31 // pred_region
          %s267 = sand.u32 %s20, 1
          %s268 = scalar_lea.sflag [#allocation4], %s267
          %s269 = sand.u32 %s42, 1
          %s270 = smul.addr %s269, 4
          %s271 = scalar_lea.vmem [#allocation3], %s270
          %273 = vsyncadd %s268, 0
          %s274 = smul.addr %s27, 4
          %s275 = scalar_lea.hbm %s0, %s274
          %s277 = sshll.u32 %s275, 4
          %s278 = int_to_ptr.hbm [resolvable:$true] %s277
          %s279 = sshll.u32 %s271, 4
          %s280 = int_to_ptr.vmem [resolvable:$true] %s279
          %282 = dma.hbm_to_vmem [thread:$0]  %s278, 64, %s280, %s268
        $region36: #{tpu_custom_call.1} parent=31 // pred_fallthru
          _
        // Predicated region
        $region37: #{tpu_custom_call.1} parent=31 // pred_check
          %p283 = pneg %p162
        $region38: #{tpu_custom_call.1} parent=31 // pred_check_branch
          %285 = sbr.rel (%p283) target = $region40
        $region39: #{tpu_custom_call.1} parent=31 // pred_region
          %s286 = sand.u32 %s20, 1
          %s287 = scalar_lea.sflag [#allocation4], %s286
          %s288 = sand.u32 %s152, 1
          %s289 = smul.addr %s288, 256
          %s290 = scalar_lea.vmem [#allocation8], %s289
          %s291 = smul.u32 4, %s28
          %293 = vsyncadd %s287, 0
          %s294 = smul.addr %s291, 4
          %s295 = scalar_lea.hbm %s5, %s294
          %s296 = sshll.u32 %s295, 4
          %s297 = int_to_ptr.hbm [resolvable:$true] %s296
          %s298 = sshll.u32 %s290, 4
          %s299 = int_to_ptr.vmem [resolvable:$true] %s298
          %304 = dma.hbm_to_vmem [thread:$0]  %s297, 4096, %s299, %s287, 512, 256, 16
        $region40: #{tpu_custom_call.1} parent=31 // pred_fallthru
          _
        // Predicated region
        $region41: #{tpu_custom_call.1} parent=31 // pred_check
          %p305 = pneg %p188
        $region42: #{tpu_custom_call.1} parent=31 // pred_check_branch
          %307 = sbr.rel (%p305) target = $region44
        $region43: #{tpu_custom_call.1} parent=31 // pred_region
          %s308 = sand.u32 %s20, 1
          %s309 = scalar_lea.sflag [#allocation4], %s308
          %s310 = sand.u32 %s178, 1
          %s311 = smul.addr %s310, 4
          %s312 = scalar_lea.vmem [#allocation9], %s311
          %s313 = smul.u32 4, %s28
          %315 = vsyncadd %s309, 0
          %s316 = scalar_lea.hbm %s6, %s313
          %s318 = sshll.u32 %s316, 4
          %s319 = int_to_ptr.hbm [resolvable:$true] %s318
          %s320 = sshll.u32 %s312, 4
          %s321 = int_to_ptr.vmem [resolvable:$true] %s320
          %323 = dma.hbm_to_vmem [thread:$0]  %s319, 64, %s321, %s309
        $region44: #{tpu_custom_call.1} parent=31 // pred_fallthru
          _
      $region32: #{tpu_custom_call.1} parent=5 // pred_fallthru
        _
      %p324 = scmp.le.s32.totalorder 1, %s20
      %p325 = scmp.lt.s32.totalorder %s20, 13
      %p326 = pnand %p324, %p325
      %p327 = pneg %p326
      // Predicated region
      $region45: #{tpu_custom_call.1} parent=5 // pred_check
        _
      $region46: #{tpu_custom_call.1} parent=5 // pred_check_branch
        %329 = sbr.rel (%p326) target = $region48
      $region47: #{tpu_custom_call.1} parent=5 // pred_region
        %s330 = ssub.s32 %s20, 1
        %s331 = sand.u32 %s25, 1
        %s332 = scalar_lea.sflag [#allocation4], %s331
        %s333 = sand.u32 %s45, 1
        %s334 = smul.addr %s333, 4
        %s335 = scalar_lea.vmem [#allocation3], %s334
        // Predicated region
        $region49: #{tpu_custom_call.1} parent=47 // pred_check
          %p336 = pneg %p58
        $region50: #{tpu_custom_call.1} parent=47 // pred_check_branch
          %338 = sbr.rel (%p336) target = $region52
        $region51: #{tpu_custom_call.1} parent=47 // pred_region
          %340 = dma.done %s332, 64
        $region52: #{tpu_custom_call.1} parent=47 // pred_fallthru
          _
        // Predicated region
        $region53: #{tpu_custom_call.1} parent=47 // pred_check
          %p341 = pneg %p79
        $region54: #{tpu_custom_call.1} parent=47 // pred_check_branch
          %343 = sbr.rel (%p341) target = $region56
        $region55: #{tpu_custom_call.1} parent=47 // pred_region
          %345 = dma.done [#allocation7], 1024
        $region56: #{tpu_custom_call.1} parent=47 // pred_fallthru
          _
        %s346 = sand.u32 %s25, 1
        %s347 = scalar_lea.sflag [#allocation4], %s346
        %s348 = sand.u32 %s155, 1
        %s349 = smul.addr %s348, 256
        %s350 = scalar_lea.vmem [#allocation8], %s349
        // Predicated region
        $region57: #{tpu_custom_call.1} parent=47 // pred_check
          %p351 = pneg %p168
        $region58: #{tpu_custom_call.1} parent=47 // pred_check_branch
          %353 = sbr.rel (%p351) target = $region60
        $region59: #{tpu_custom_call.1} parent=47 // pred_region
          %355 = dma.done %s347, 4096
        $region60: #{tpu_custom_call.1} parent=47 // pred_fallthru
          _
        %s356 = sand.u32 %s25, 1
        %s357 = scalar_lea.sflag [#allocation4], %s356
        %s358 = sand.u32 %s181, 1
        %s359 = smul.addr %s358, 4
        %s360 = scalar_lea.vmem [#allocation9], %s359
        // Predicated region
        $region61: #{tpu_custom_call.1} parent=47 // pred_check
          %p361 = pneg %p194
        $region62: #{tpu_custom_call.1} parent=47 // pred_check_branch
          %363 = sbr.rel (%p361) target = $region64
        $region63: #{tpu_custom_call.1} parent=47 // pred_region
          %365 = dma.done %s357, 64
        $region64: #{tpu_custom_call.1} parent=47 // pred_fallthru
          _
        %s366 = sand.u32 %s25, 1
        %s367 = scalar_lea.sflag [#allocation4], %s366
        %s368 = sand.u32 %s45, 1
        %s369 = smul.addr %s368, 4
        %s370 = scalar_lea.vmem [#allocation3], %s369
        %p371 = pneg %p58
        %p372 = pneg %p55
        %p373 = pneg %p79
        %p374 = pneg %p76
        %p375 = pneg %p100
        %p376 = pneg %p97
        %p377 = pneg %p121
        %p378 = pneg %p118
        %p379 = pneg %p142
        %p380 = pneg %p139
        %s381 = sand.u32 %s25, 1
        %s382 = scalar_lea.sflag [#allocation4], %s381
        %s383 = sand.u32 %s155, 1
        %s384 = smul.addr %s383, 256
        %s385 = scalar_lea.vmem [#allocation8], %s384
        %p386 = pneg %p168
        %p387 = pneg %p165
        %s388 = sand.u32 %s25, 1
        %s389 = scalar_lea.sflag [#allocation4], %s388
        %s390 = sand.u32 %s181, 1
        %s391 = smul.addr %s390, 4
        %s392 = scalar_lea.vmem [#allocation9], %s391
        %p393 = pneg %p194
        %p394 = pneg %p191
        %p395 = pneg %p222
        %p396 = pneg %p219
        %s397 = sand.u32 %s209, 1
        %s398 = scalar_lea.sflag [#allocation5], %s397
        %s399 = sand.u32 %s209, 1
        %s400 = smul.addr %s399, 32
        %s401 = scalar_lea.vmem [#allocation10], %s400
        %s402 = smul.u32 4, %s30
        %s403 = smul.u32 4, %s30
        %s404 = smul.u32 4, %s30
        %p405 = scmp.eq.s32.totalorder %s30, 0
        // Predicated region
        $region65: #{tpu_custom_call.1} parent=47 // pred_check
          %p406 = pneg %p405
        $region66: #{tpu_custom_call.1} parent=47 // pred_check_branch
          %408 = sbr.rel (%p406) target = $region68
        $region67: #{tpu_custom_call.1} parent=47 // pred_region
          %v409 = vld [vmem:[%s335] sm:$0xf]
          %v410 = vld [vmem:[#allocation6] sm:$0xf]
          %v411 = vld [vmem:[#allocation6 + $0x4] sm:$0xf]
          %v412 = vld [vmem:[#allocation6 + $0x8] sm:$0xf]
          %v413 = vld [vmem:[#allocation6 + $0xc] sm:$0xf]
          %v414 = vld [vmem:[#allocation6 + $0x10] sm:$0xf]
          %v415 = vld [vmem:[#allocation6 + $0x14] sm:$0xf]
          %v416 = vld [vmem:[#allocation6 + $0x18] sm:$0xf]
          %v417 = vld [vmem:[#allocation6 + $0x1c] sm:$0xf]
          %v418 = vld [vmem:[#allocation6 + $0x20] sm:$0xf]
          %v419 = vld [vmem:[#allocation6 + $0x24] sm:$0xf]
          %v420 = vld [vmem:[#allocation6 + $0x28] sm:$0xf]
          %v421 = vld [vmem:[#allocation6 + $0x2c] sm:$0xf]
          %v422 = vld [vmem:[#allocation6 + $0x30] sm:$0xf]
          %v423 = vld [vmem:[#allocation6 + $0x34] sm:$0xf]
          %v424 = vld [vmem:[#allocation6 + $0x38] sm:$0xf]
          %v425 = vld [vmem:[#allocation6 + $0x3c] sm:$0xf]
          %v426 = vld [vmem:[%s2] sm:$0x1]
          %v428 = vperm.slane %v426, 0
          %v446 = vunpack.c.l.b16 %v410
          %v447 = vunpack.c.l.b16 %v411
          %v448 = vunpack.c.l.b16 %v412
          %v449 = vunpack.c.l.b16 %v413
          %v450 = vunpack.c.l.b16 %v414
          %v451 = vunpack.c.l.b16 %v415
          %v452 = vunpack.c.l.b16 %v416
          %v453 = vunpack.c.l.b16 %v417
          %v454 = vunpack.c.l.b16 %v418
          %v455 = vunpack.c.l.b16 %v419
          %v456 = vunpack.c.l.b16 %v420
          %v457 = vunpack.c.l.b16 %v421
          %v458 = vunpack.c.l.b16 %v422
          %v459 = vunpack.c.l.b16 %v423
          %v460 = vunpack.c.l.b16 %v424
          %v461 = vunpack.c.l.b16 %v425
          %v462 = vpack.c.b16 %v447, %v446
          %v463 = vpack.c.b16 %v449, %v448
          %v464 = vpack.c.b16 %v451, %v450
          %v465 = vpack.c.b16 %v453, %v452
          %v466 = vpack.c.b16 %v455, %v454
          %v467 = vpack.c.b16 %v457, %v456
          %v468 = vpack.c.b16 %v459, %v458
          %v469 = vpack.c.b16 %v461, %v460
          %478 = vmatpush.bf16.msra.mxu0 %v469
          %479 = vmatpush.bf16.msra.mxu0 %v468
          %480 = vmatpush.bf16.msra.mxu0 %v467
          %481 = vmatpush.bf16.msra.mxu0 %v466
          %482 = vmatpush.bf16.msra.mxu0 %v465
          %483 = vmatpush.bf16.msra.mxu0 %v464
          %484 = vmatpush.bf16.msra.mxu0 %v463
          %485 = vmatpush.bf16.msra.mxu0 %v462
          %486 = vmatmul.bf16.gmra.mxu0 %v409
          %v487 = vpop.f32.mrf.mxu0
          %v488 = vadd.f32 %v428, %v487
          %v489 = vpop.f32.mrf.mxu0
          %490 = vdwg.mxu0
          %v491 = vmul.f32 %v488, 0.5
          %v492 = vmul.f32 %v488, 0.70710677
          %v493 = vmul.f32 %v492, %v492
          %v494 = vmin.f32 16.0, %v493
          %v495 = vmul.f32 %v494, 2.1237322e-06
          %v496 = vadd.f32 %v495, 0.00028619796
          %v497 = vmul.f32 %v494, %v496
          %v498 = vadd.f32 %v497, 0.0036580483
          %v499 = vmul.f32 %v494, %v498
          %v500 = vadd.f32 %v499, 0.05243302
          %v501 = vmul.f32 %v494, %v500
          %v502 = vadd.f32 %v501, 0.18741608
          %v503 = vmul.f32 %v494, %v502
          %v504 = vadd.f32 %v503, 1.1283791
          %v505 = vmul.f32 %v492, %v504
          %v506 = vmul.f32 %v494, 3.8918573e-05
          %v507 = vadd.f32 %v506, 0.001143296
          %v508 = vmul.f32 %v494, %v507
          %v509 = vadd.f32 %v508, 0.014752088
          %v510 = vmul.f32 %v494, %v509
          %v511 = vadd.f32 %v510, 0.112945676
          %v512 = vmul.f32 %v494, %v511
          %v513 = vadd.f32 %v512, 0.4994258
          %v514 = vmul.f32 %v494, %v513
          %v515 = vadd.f32 %v514, 1.0
          %v516 = vrcp.pop %v515
          %v517 = vmul.f32 %v515, %v516
          %v518 = vsub.f32 1.0, %v517
          %v519 = vmul.f32 %v516, %v518
          %v520 = vadd.f32 %v516, %v519
          %vm521 = vweird.f32 %v515
          %vm522 = vweird.f32 %v516
          %vm523 = vmor %vm521, %vm522
          %v524 = vsel %vm523, %v516, %v520
          %v525 = vand.u32 2147483647, %v515
          %vm526 = vcmp.eq.f32.partialorder %v525, 8.507059e+37
          %v527 = vand.u32 %v515, 2147483648
          %v528 = vor.u32 1.1754944e-38, %v527
          %v529 = vsel %vm526, %v528, %v524
          %v530 = vmul.f32 %v505, %v529
          %v531 = vmin.f32 %v530, 1.0
          %v532 = vmax.f32 %v531, -1.0
          %v533 = vadd.f32 %v532, 1.0
          %v534 = vmul.f32 %v491, %v533
          %535 = vadd.xlane.f32.xlu0 %v534
          %v536 = vpop.xlane.xlu0 %535
          %v537 = vrcp.pop 128.0
          %v538 = vmul.f32 128.0, %v537
          %v539 = vsub.f32 1.0, %v538
          %v540 = vmul.f32 %v537, %v539
          %v541 = vadd.f32 %v537, %v540
          %vm542 = vweird.f32 %v537
          %v543 = vsel %vm542, %v537, %v541
          %v544 = vmul.f32 %v536, %v543
          %v545 = vmul.f32 %v534, %v534
          %546 = vadd.xlane.f32.xlu0 %v545
          %v547 = vpop.xlane.xlu0 %546
          %v548 = vmul.f32 %v547, %v543
          %v549 = vmul.f32 %v544, %v544
          %v550 = vsub.f32 %v548, %v549
          %v551 = vmax.f32 %v550, 0.0
          %v552 = vsub.f32 %v534, %v544
          %v553 = vadd.f32 %v551, 1e-12
          %v554 = vrsqrt.pop %v553
          %v555 = vmul.f32 %v554, %v553
          %v556 = vmul.f32 %v555, %v554
          %v557 = vmul.f32 0.5, %v556
          %v558 = vsub.f32 1.5, %v557
          %v559 = vmul.f32 %v554, %v558
          %vm560 = vweird.f32 %v553
          %vm561 = vweird.f32 %v554
          %vm562 = vmor %vm560, %vm561
          %v563 = vsel %vm562, %v554, %v559
          %v564 = vmul.f32 %v552, %v563
          %v565 = vld [vmem:[%s3] sm:$0x1]
          %v567 = vperm.slane %v565, 0
          %v569 = vmul.f32 %v564, %v567
          %v570 = vld [vmem:[%s4] sm:$0x1]
          %v572 = vperm.slane %v570, 0
          %v574 = vadd.f32 %v569, %v572
          %v575 = vpack.c.bf16 %v574, %v574
          %576 = vst [vmem:[#allocation2] sm:$0xf] %v575
        $region68: #{tpu_custom_call.1} parent=47 // pred_fallthru
          _
        %v577 = vld [vmem:[#allocation2] sm:$0xf]
        %v578 = vld [vmem:[%s350] sm:$0xff]
        %v579 = vld [vmem:[%s350 + $0x8] sm:$0xff]
        %v580 = vld [vmem:[%s350 + $0x10] sm:$0xff]
        %v581 = vld [vmem:[%s350 + $0x18] sm:$0xff]
        %v582 = vld [vmem:[%s350 + $0x20] sm:$0xff]
        %v583 = vld [vmem:[%s350 + $0x28] sm:$0xff]
        %v584 = vld [vmem:[%s350 + $0x30] sm:$0xff]
        %v585 = vld [vmem:[%s350 + $0x38] sm:$0xff]
        %v586 = vld [vmem:[%s350 + $0x40] sm:$0xff]
        %v587 = vld [vmem:[%s350 + $0x48] sm:$0xff]
        %v588 = vld [vmem:[%s350 + $0x50] sm:$0xff]
        %v589 = vld [vmem:[%s350 + $0x58] sm:$0xff]
        %v590 = vld [vmem:[%s350 + $0x60] sm:$0xff]
        %v591 = vld [vmem:[%s350 + $0x68] sm:$0xff]
        %v592 = vld [vmem:[%s350 + $0x70] sm:$0xff]
        %v593 = vld [vmem:[%s350 + $0x78] sm:$0xff]
        %v594 = vld [vmem:[%s350 + $0x80] sm:$0xff]
        %v595 = vld [vmem:[%s350 + $0x88] sm:$0xff]
        %v596 = vld [vmem:[%s350 + $0x90] sm:$0xff]
        %v597 = vld [vmem:[%s350 + $0x98] sm:$0xff]
        %v598 = vld [vmem:[%s350 + $0xa0] sm:$0xff]
        %v599 = vld [vmem:[%s350 + $0xa8] sm:$0xff]
        %v600 = vld [vmem:[%s350 + $0xb0] sm:$0xff]
        %v601 = vld [vmem:[%s350 + $0xb8] sm:$0xff]
        %v602 = vld [vmem:[%s350 + $0xc0] sm:$0xff]
        %v603 = vld [vmem:[%s350 + $0xc8] sm:$0xff]
        %v604 = vld [vmem:[%s350 + $0xd0] sm:$0xff]
        %v605 = vld [vmem:[%s350 + $0xd8] sm:$0xff]
        %v606 = vld [vmem:[%s350 + $0xe0] sm:$0xff]
        %v607 = vld [vmem:[%s350 + $0xe8] sm:$0xff]
        %v608 = vld [vmem:[%s350 + $0xf0] sm:$0xff]
        %v609 = vld [vmem:[%s350 + $0xf8] sm:$0xff]
        %v610 = vld [vmem:[%s360] sm:$0xf]
        %v612 = vperm.slane %v610, 0
        %v613 = vperm.slane %v610, 1
        %v614 = vperm.slane %v610, 2
        %v615 = vperm.slane %v610, 3
        %v652 = vunpack.c.l.b16 %v578
        %v653 = vunpack.c.h.b16 %v578
        %v654 = vunpack.c.l.b16 %v579
        %v655 = vunpack.c.h.b16 %v579
        %v656 = vunpack.c.l.b16 %v580
        %v657 = vunpack.c.h.b16 %v580
        %v658 = vunpack.c.l.b16 %v581
        %v659 = vunpack.c.h.b16 %v581
        %v660 = vunpack.c.l.b16 %v582
        %v661 = vunpack.c.h.b16 %v582
        %v662 = vunpack.c.l.b16 %v583
        %v663 = vunpack.c.h.b16 %v583
        %v664 = vunpack.c.l.b16 %v584
        %v665 = vunpack.c.h.b16 %v584
        %v666 = vunpack.c.l.b16 %v585
        %v667 = vunpack.c.h.b16 %v585
        %v668 = vunpack.c.l.b16 %v586
        %v669 = vunpack.c.h.b16 %v586
        %v670 = vunpack.c.l.b16 %v587
        %v671 = vunpack.c.h.b16 %v587
        %v672 = vunpack.c.l.b16 %v588
        %v673 = vunpack.c.h.b16 %v588
        %v674 = vunpack.c.l.b16 %v589
        %v675 = vunpack.c.h.b16 %v589
        %v676 = vunpack.c.l.b16 %v590
        %v677 = vunpack.c.h.b16 %v590
        %v678 = vunpack.c.l.b16 %v591
        %v679 = vunpack.c.h.b16 %v591
        %v680 = vunpack.c.l.b16 %v592
        %v681 = vunpack.c.h.b16 %v592
        %v682 = vunpack.c.l.b16 %v593
        %v683 = vunpack.c.h.b16 %v593
        %v684 = vunpack.c.l.b16 %v594
        %v685 = vunpack.c.h.b16 %v594
        %v686 = vunpack.c.l.b16 %v595
        %v687 = vunpack.c.h.b16 %v595
        %v688 = vunpack.c.l.b16 %v596
        %v689 = vunpack.c.h.b16 %v596
        %v690 = vunpack.c.l.b16 %v597
        %v691 = vunpack.c.h.b16 %v597
        %v692 = vunpack.c.l.b16 %v598
        %v693 = vunpack.c.h.b16 %v598
        %v694 = vunpack.c.l.b16 %v599
        %v695 = vunpack.c.h.b16 %v599
        %v696 = vunpack.c.l.b16 %v600
        %v697 = vunpack.c.h.b16 %v600
        %v698 = vunpack.c.l.b16 %v601
        %v699 = vunpack.c.h.b16 %v601
        %v700 = vunpack.c.l.b16 %v602
        %v701 = vunpack.c.h.b16 %v602
        %v702 = vunpack.c.l.b16 %v603
        %v703 = vunpack.c.h.b16 %v603
        %v704 = vunpack.c.l.b16 %v604
        %v705 = vunpack.c.h.b16 %v604
        %v706 = vunpack.c.l.b16 %v605
        %v707 = vunpack.c.h.b16 %v605
        %v708 = vunpack.c.l.b16 %v606
        %v709 = vunpack.c.h.b16 %v606
        %v710 = vunpack.c.l.b16 %v607
        %v711 = vunpack.c.h.b16 %v607
        %v712 = vunpack.c.l.b16 %v608
        %v713 = vunpack.c.h.b16 %v608
        %v714 = vunpack.c.l.b16 %v609
        %v715 = vunpack.c.h.b16 %v609
        %v716 = vpack.c.b16 %v656, %v652
        %v717 = vpack.c.b16 %v657, %v653
        %v718 = vpack.c.b16 %v658, %v654
        %v719 = vpack.c.b16 %v659, %v655
        %v720 = vpack.c.b16 %v664, %v660
        %v721 = vpack.c.b16 %v665, %v661
        %v722 = vpack.c.b16 %v666, %v662
        %v723 = vpack.c.b16 %v667, %v663
        %v724 = vpack.c.b16 %v672, %v668
        %v725 = vpack.c.b16 %v673, %v669
        %v726 = vpack.c.b16 %v674, %v670
        %v727 = vpack.c.b16 %v675, %v671
        %v728 = vpack.c.b16 %v680, %v676
        %v729 = vpack.c.b16 %v681, %v677
        %v730 = vpack.c.b16 %v682, %v678
        %v731 = vpack.c.b16 %v683, %v679
        %v732 = vpack.c.b16 %v688, %v684
        %v733 = vpack.c.b16 %v689, %v685
        %v734 = vpack.c.b16 %v690, %v686
        %v735 = vpack.c.b16 %v691, %v687
        %v736 = vpack.c.b16 %v696, %v692
        %v737 = vpack.c.b16 %v697, %v693
        %v738 = vpack.c.b16 %v698, %v694
        %v739 = vpack.c.b16 %v699, %v695
        %v740 = vpack.c.b16 %v704, %v700
        %v741 = vpack.c.b16 %v705, %v701
        %v742 = vpack.c.b16 %v706, %v702
        %v743 = vpack.c.b16 %v707, %v703
        %v744 = vpack.c.b16 %v712, %v708
        %v745 = vpack.c.b16 %v713, %v709
        %v746 = vpack.c.b16 %v714, %v710
        %v747 = vpack.c.b16 %v715, %v711
        %780 = vmatpush.bf16.msra.mxu0 %v744
        %781 = vmatpush.bf16.msra.mxu0 %v740
        %782 = vmatpush.bf16.msra.mxu0 %v736
        %783 = vmatpush.bf16.msra.mxu0 %v732
        %784 = vmatpush.bf16.msra.mxu0 %v728
        %785 = vmatpush.bf16.msra.mxu0 %v724
        %786 = vmatpush.bf16.msra.mxu0 %v720
        %787 = vmatpush.bf16.msra.mxu0 %v716
        %788 = vmatmul.bf16.gmra.mxu0 %v577
        %v789 = vpop.f32.mrf.mxu0
        %v790 = vadd.f32 %v612, %v789
        %v791 = vpop.f32.mrf.mxu0
        %792 = vdwg.mxu0
        %793 = vmatpush.bf16.msra.mxu0 %v745
        %794 = vmatpush.bf16.msra.mxu0 %v741
        %795 = vmatpush.bf16.msra.mxu0 %v737
        %796 = vmatpush.bf16.msra.mxu0 %v733
        %797 = vmatpush.bf16.msra.mxu0 %v729
        %798 = vmatpush.bf16.msra.mxu0 %v725
        %799 = vmatpush.bf16.msra.mxu0 %v721
        %800 = vmatpush.bf16.msra.mxu0 %v717
        %801 = vmatmul.bf16.gmra.mxu0 %v577
        %v802 = vpop.f32.mrf.mxu0
        %v803 = vadd.f32 %v613, %v802
        %v804 = vpop.f32.mrf.mxu0
        %805 = vdwg.mxu0
        %806 = vmatpush.bf16.msra.mxu0 %v746
        %807 = vmatpush.bf16.msra.mxu0 %v742
        %808 = vmatpush.bf16.msra.mxu0 %v738
        %809 = vmatpush.bf16.msra.mxu0 %v734
        %810 = vmatpush.bf16.msra.mxu0 %v730
        %811 = vmatpush.bf16.msra.mxu0 %v726
        %812 = vmatpush.bf16.msra.mxu0 %v722
        %813 = vmatpush.bf16.msra.mxu0 %v718
        %814 = vmatmul.bf16.gmra.mxu0 %v577
        %v815 = vpop.f32.mrf.mxu0
        %v816 = vadd.f32 %v614, %v815
        %v817 = vpop.f32.mrf.mxu0
        %818 = vdwg.mxu0
        %819 = vmatpush.bf16.msra.mxu0 %v747
        %820 = vmatpush.bf16.msra.mxu0 %v743
        %821 = vmatpush.bf16.msra.mxu0 %v739
        %822 = vmatpush.bf16.msra.mxu0 %v735
        %823 = vmatpush.bf16.msra.mxu0 %v731
        %824 = vmatpush.bf16.msra.mxu0 %v727
        %825 = vmatpush.bf16.msra.mxu0 %v723
        %826 = vmatpush.bf16.msra.mxu0 %v719
        %827 = vmatmul.bf16.gmra.mxu0 %v577
        %v828 = vpop.f32.mrf.mxu0
        %v829 = vadd.f32 %v615, %v828
        %v830 = vpop.f32.mrf.mxu0
        %831 = vdwg.mxu0
        %832 = vst [vmem:[%s401] sm:$0xff] %v790
        %833 = vst [vmem:[%s401 + $0x8] sm:$0xff] %v803
        %834 = vst [vmem:[%s401 + $0x10] sm:$0xff] %v816
        %835 = vst [vmem:[%s401 + $0x18] sm:$0xff] %v829
        %s836 = sand.u32 %s209, 1
        %s837 = scalar_lea.sflag [#allocation5], %s836
        %s838 = sand.u32 %s209, 1
        %s839 = smul.addr %s838, 32
        %s840 = scalar_lea.vmem [#allocation10], %s839
        // Predicated region
        $region69: #{tpu_custom_call.1} parent=47 // pred_check
          %p841 = pneg %p219
        $region70: #{tpu_custom_call.1} parent=47 // pred_check_branch
          %843 = sbr.rel (%p841) target = $region72
        $region71: #{tpu_custom_call.1} parent=47 // pred_region
          %s844 = smul.u32 4, %s30
          %846 = vsyncadd %s837, 0
          %s847 = smul.addr %s29, 8
          %s848 = sadd.s32 %s844, %s847
          %s849 = smul.addr %s848, 8
          %s850 = scalar_lea.hbm %s7, %s849
          %s852 = sshll.u32 %s840, 4
          %s853 = int_to_ptr.vmem [resolvable:$true] %s852
          %s854 = sshll.u32 %s850, 4
          %s855 = int_to_ptr.hbm [resolvable:$true] %s854
          %857 = dma.vmem_to_hbm [thread:$0]  %s853, 512, %s855, %s837
        $region72: #{tpu_custom_call.1} parent=47 // pred_fallthru
          _
      $region48: #{tpu_custom_call.1} parent=5 // pred_fallthru
        _
      %p858 = scmp.le.s32.totalorder 2, %s20
      // Predicated region
      $region73: #{tpu_custom_call.1} parent=5 // pred_check
        %p859 = pneg %p858
      $region74: #{tpu_custom_call.1} parent=5 // pred_check_branch
        %861 = sbr.rel (%p859) target = $region76
      $region75: #{tpu_custom_call.1} parent=5 // pred_region
        %s862 = ssub.s32 %s20, 2
        // Predicated region
        $region77: #{tpu_custom_call.1} parent=75 // pred_check
          %p863 = pneg %p225
        $region78: #{tpu_custom_call.1} parent=75 // pred_check_branch
          %865 = sbr.rel (%p863) target = $region80
        $region79: #{tpu_custom_call.1} parent=75 // pred_region
          %s866 = sand.u32 %s210, 1
          %s867 = scalar_lea.sflag [#allocation5], %s866
          %s868 = sand.u32 %s210, 1
          %s869 = smul.addr %s868, 32
          %s870 = scalar_lea.vmem [#allocation10], %s869
          %872 = dma.done %s867, 512
        $region80: #{tpu_custom_call.1} parent=75 // pred_fallthru
          _
      $region76: #{tpu_custom_call.1} parent=5 // pred_fallthru
        _
    $region6: #{tpu_custom_call.1} parent=1 // loop_footer
      %s24 = sadd.s32 1, %s20
    $region7: #{tpu_custom_call.1} parent=1 // loop_footer_branch
      %19 = sbr.rel target = $region3
    $region8: #{tpu_custom_call.1} parent=1 // loop_exit
      _
    %873 = vsyncpa [#allocation4], 1
    %s874 = scalar_lea.sflag [#allocation4], 1
    %875 = vsyncpa %s874, 1
    %876 = vsyncpa [#allocation7], 1
    %877 = vsyncpa [#allocation5], 1
    %s878 = scalar_lea.sflag [#allocation5], 1
    %879 = vsyncpa %s878, 1

</llo_original>
